<compile_context>
chip_gen: v6e
topology: v6e:2x2x1
jax: 0.10.0
libtpu: 0.0.40
codegen_flags: <defaults>
</compile_context>

<pallas_src>
import math
from functools import partial

import jax
import jax.numpy as jnp
from jax.experimental import pallas as pl
from jax.experimental.pallas import tpu as pltpu


def patch_embed_kernel(p_ref, w_ref, pos_ref, cls_ref, out_ref, *, tb, num_patches):
    """One (TM, TN) matmul tile -> TB full batches of the final (P+1, TN) output.

    p_ref:   (TM, K)         compute dtype, TM = tb * num_patches
    w_ref:   (K, TN)         compute dtype
    pos_ref: (P, TN)   f32   pos rows 1..P with the conv bias folded in
    cls_ref: (1, TN)   f32   cls token + pos row 0
    out_ref: (TB, P+1, TN)   output dtype — fully written each grid step
    """
    acc = jnp.dot(p_ref[...], w_ref[...], preferred_element_type=jnp.float32)  # (TM, TN) f32
    tn = out_ref.shape[-1]
    # Broadcast pos over the TB batches of this tile (replaces the HBM-side jnp.tile).
    # NOTE: for P not a multiple of 8 this reshape is a VMEM relayout (XLU work),
    # still far cheaper than the M x E x 4B HBM array it replaces.
    acc = acc.reshape(tb, num_patches, tn) + pos_ref[...]
    out_ref[:, 0:1, :] = jnp.broadcast_to(cls_ref[...], (tb, 1, tn)).astype(out_ref.dtype)
    out_ref[:, 1:, :] = acc.astype(out_ref.dtype)


def _pick_tb(B, P, align, target_rows=512):
    """Batches per M-tile. TM = TB*P is a multiple of `align` rows, targets
    ~target_rows, and prefers >= 2 grid steps over M. Never collapses to a
    full-batch tile for large B."""
    g = math.gcd(P, align)
    tb_unit = max(1, align // g)              # smallest TB with (TB*P) % align == 0
    if B <= tb_unit:
        return B                              # single full-extent M tile (always legal)
    n_units = max(1, target_rows // (tb_unit * P))
    tb = tb_unit * n_units
    tb = min(tb, tb_unit * (B // tb_unit))    # don't exceed the aligned batch count
    while tb > tb_unit and pl.cdiv(B, tb) < 2:
        tb -= tb_unit                         # prefer >= 2 M tiles (pipelining/megacore)
    return tb


def _pick_tn(E_pad, num_m_tiles):
    """Embed-dim tile width: ~256-wide (MXU-friendly) when E is large; split E when
    the M axis has only one tile so the v7x megacore still has >= 2 grid steps."""
    if E_pad % 128 != 0:
        return E_pad                          # small / unpadded E: single N tile
    n128 = E_pad // 128
    if n128 >= 4 and E_pad % 256 == 0:
        return 256
    if num_m_tiles == 1 and n128 >= 2 and n128 % 2 == 0:
        return 128 * (n128 // 2)
    return E_pad


def _vmem_limit_bytes(TM, TN, K, P, TB, compute_dtype, out_dtype):
    cb = jnp.dtype(compute_dtype).itemsize
    ob = jnp.dtype(out_dtype).itemsize
    est = (2 * TM * K * cb                    # patches (double-buffered)
           + 2 * K * TN * cb                  # weights
           + 2 * (P + 1) * TN * 4             # pos + cls (f32)
           + 2 * TB * (P + 1) * TN * ob)      # output block
    est = int(est * 1.5) + (4 << 20)          # headroom for relayouts / compiler scratch
    return max(32 << 20, min(64 << 20, est))  # 64 MiB cap keeps v7x (64 MiB VMEM) safe


def patch_embedding(x, conv_w, conv_b, cls_token, pos_emb, patch_size,
                    compute_dtype=jnp.bfloat16):
    """x: (B, C, H, W) NCHW. Returns (B, num_patches + 1, embed_dim). Eval mode."""
    B, C, H, W = x.shape
    ps = patch_size
    assert H % ps == 0 and W % ps == 0, "H, W must be divisible by patch_size"
    Hp, Wp = H // ps, W // ps
    P = Hp * Wp
    E = conv_w.shape[0]
    K = C * ps * ps
    out_dtype = x.dtype

    # ---- glue: patch extraction; (c, kh, kw) flatten matches Conv2d weight layout ----
    patches = x.reshape(B, C, Hp, ps, Wp, ps)
    patches = patches.transpose(0, 2, 4, 1, 3, 5).reshape(B * P, K).astype(compute_dtype)

    w2d = conv_w.reshape(E, K).T.astype(compute_dtype)                 # (K, E)
    pos = pos_emb.reshape(P + 1, E).astype(jnp.float32)
    bias = conv_b.reshape(1, E).astype(jnp.float32)
    pos_pb = pos[1:] + bias                                            # (P, E)  rows 1..P
    cls_row = cls_token.reshape(1, E).astype(jnp.float32) + pos[0:1]   # (1, E)  row 0

    # ---- lane padding policy: only pad E when it helps (E >= 128, not 128-multiple) ----
    E_pad = E if (E % 128 == 0 or E < 128) else ((E + 127) // 128) * 128
    if E_pad != E:
        w2d = jnp.pad(w2d, ((0, 0), (0, E_pad - E)))
        pos_pb = jnp.pad(pos_pb, ((0, 0), (0, E_pad - E)))
        cls_row = jnp.pad(cls_row, ((0, 0), (0, E_pad - E)))

    # ---- tiling: batch folded into M; ~512-row aligned tiles; 2-D grid ----
    align = 16 if jnp.dtype(compute_dtype).itemsize == 2 else 8
    TB = _pick_tb(B, P, align)
    TM = TB * P
    num_m_tiles = pl.cdiv(B, TB)
    B_pad = num_m_tiles * TB
    if B_pad != B:
        patches = jnp.pad(patches, ((0, (B_pad - B) * P), (0, 0)))

    TN = _pick_tn(E_pad, num_m_tiles)
    num_n_tiles = E_pad // TN

    kernel = partial(patch_embed_kernel, tb=TB, num_patches=P)
    out_full = pl.pallas_call(
        kernel,
        out_shape=jax.ShapeDtypeStruct((B_pad, P + 1, E_pad), out_dtype),
        grid_spec=pltpu.PrefetchScalarGridSpec(
            num_scalar_prefetch=0,
            grid=(num_m_tiles, num_n_tiles),
            in_specs=[
                pl.BlockSpec((TM, K), lambda i, j: (i, 0)),      # patches: per M tile
                pl.BlockSpec((K, TN), lambda i, j: (0, j)),      # weights: per N tile
                pl.BlockSpec((P, TN), lambda i, j: (0, j)),      # pos+bias: per N tile
                pl.BlockSpec((1, TN), lambda i, j: (0, j)),      # cls+pos0: per N tile
            ],
            out_specs=pl.BlockSpec((TB, P + 1, TN), lambda i, j: (i, 0, j)),
        ),
        compiler_params=pltpu.CompilerParams(
            dimension_semantics=("parallel", "parallel"),
            vmem_limit_bytes=_vmem_limit_bytes(TM, TN, K, P, TB, compute_dtype, out_dtype),
        ),
    )(patches, w2d, pos_pb, cls_row)

    # ---- epilogue: only strip padding (no concatenate; usually a no-op) ----
    out = out_full
    if B_pad != B:
        out = out[:B]
    if E_pad != E:
        out = out[..., :E]
    return out
    # TODO(synk): dropout (p>0 training mode) not implemented; eval-mode identity.


def _reference(x, conv_w, conv_b, cls_token, pos_emb, patch_size):
    """Pure-JAX f32 reference matching the PyTorch forward (eval mode)."""
    B = x.shape[0]
    y = jax.lax.conv_general_dilated(
        x, conv_w,
        window_strides=(patch_size, patch_size),
        padding="VALID",
        dimension_numbers=("NCHW", "OIHW", "NCHW"),
    ) + conv_b.reshape(1, -1, 1, 1)
    E = conv_w.shape[0]
    y = y.reshape(B, E, -1).transpose(0, 2, 1)          # (B, P, E)
    cls = jnp.broadcast_to(cls_token, (B, 1, E))
    y = jnp.concatenate([cls, y], axis=1)
    return y + pos_emb


if __name__ == "__main__":
    # Small shapes consistent with the module:
    B, C, H, W = 2, 4, 16, 16
    patch_size = 4
    embed_dim = 32
    num_patches = (H // patch_size) * (W // patch_size)   # 16

    key = jax.random.PRNGKey(0)
    kx, kw, kb, kc, kp = jax.random.split(key, 5)

    x = jax.random.normal(kx, (B, C, H, W), dtype=jnp.float32)
    conv_w = jax.random.normal(kw, (embed_dim, C, patch_size, patch_size),
                               dtype=jnp.float32) * 0.05
    conv_b = jax.random.normal(kb, (embed_dim,), dtype=jnp.float32) * 0.05
    cls_token = jax.random.normal(kc, (1, 1, embed_dim), dtype=jnp.float32)
    pos_emb = jax.random.normal(kp, (1, num_patches + 1, embed_dim),
                                dtype=jnp.float32)

    ref = _reference(x, conv_w, conv_b, cls_token, pos_emb, patch_size)

    # f32 compute path (tight tolerance).
    out_f32 = jax.block_until_ready(
        patch_embedding(x, conv_w, conv_b, cls_token, pos_emb, patch_size,
                        compute_dtype=jnp.float32))
    assert out_f32.shape == (B, num_patches + 1, embed_dim), out_f32.shape
    assert jnp.allclose(out_f32, ref, rtol=1e-5, atol=1e-5), "f32 mismatch vs reference"

    # bf16 compute path (default; MXU-native on all generations), looser tolerance.
    out_bf16 = jax.block_until_ready(
        patch_embedding(x, conv_w, conv_b, cls_token, pos_emb, patch_size,
                        compute_dtype=jnp.bfloat16))
    assert out_bf16.shape == (B, num_patches + 1, embed_dim), out_bf16.shape
    assert jnp.allclose(out_bf16, ref, rtol=2e-2, atol=2e-2), "bf16 mismatch vs reference"

    print("KERNEL_OK")
</pallas_src>

<mosaic_0001>
module attributes {stable_mosaic.version = 11 : i64} {
  func.func @patch_embed_kernel(%arg0: i32, %arg1: i32, %arg2: memref<16x64xf32, #tpu.memory_space<vmem>>, %arg3: memref<64x32xf32, #tpu.memory_space<vmem>>, %arg4: memref<16x32xf32, #tpu.memory_space<vmem>>, %arg5: memref<1x32xf32, #tpu.memory_space<vmem>>, %arg6: memref<1x17x32xf32, #tpu.memory_space<vmem>>) attributes {dimension_semantics = [#tpu.dimension_semantics<parallel>, #tpu.dimension_semantics<parallel>], iteration_bounds = array<i64: 2, 1>, scalar_prefetch = 0 : i64, scratch_operands = 0 : i64, tpu.core_type = #tpu.core_type<tc>, window_params = [{transform_indices = @transform_0, window_bounds = array<i64: 16, 64>}, {transform_indices = @transform_1, window_bounds = array<i64: 64, 32>}, {transform_indices = @transform_2, window_bounds = array<i64: 16, 32>}, {transform_indices = @transform_3, window_bounds = array<i64: 1, 32>}, {transform_indices = @transform_4, window_bounds = array<i64: 1, 17, 32>}]} {
    %c0 = arith.constant 0 : index
    %c0_0 = arith.constant 0 : index
    %0 = vector.load %arg2[%c0, %c0_0] : memref<16x64xf32, #tpu.memory_space<vmem>>, vector<16x64xf32>
    %c0_1 = arith.constant 0 : index
    %c0_2 = arith.constant 0 : index
    %1 = vector.load %arg3[%c0_1, %c0_2] : memref<64x32xf32, #tpu.memory_space<vmem>>, vector<64x32xf32>
    %cst = arith.constant dense<0.000000e+00> : vector<16x32xf32>
    %2 = tpu.matmul %0, %1, %cst {dimension_numbers = #tpu.dot_dimension_numbers<[1], [0], [0], [1], [0, 0, 1, 1], [], []>} : vector<16x64xf32>, vector<64x32xf32>, vector<16x32xf32> -> vector<16x32xf32>
    %3 = vector.shape_cast %2 : vector<16x32xf32> to vector<1x16x32xf32>
    %c0_3 = arith.constant 0 : index
    %c0_4 = arith.constant 0 : index
    %4 = vector.load %arg4[%c0_3, %c0_4] : memref<16x32xf32, #tpu.memory_space<vmem>>, vector<16x32xf32>
    %5 = vector.shape_cast %4 : vector<16x32xf32> to vector<1x16x32xf32>
    %6 = arith.addf %3, %5 : vector<1x16x32xf32>
    %c0_5 = arith.constant 0 : index
    %c0_6 = arith.constant 0 : index
    %7 = vector.load %arg5[%c0_5, %c0_6] : memref<1x32xf32, #tpu.memory_space<vmem>>, vector<1x32xf32>
    %8 = vector.shape_cast %7 : vector<1x32xf32> to vector<1x1x32xf32>
    %c0_7 = arith.constant 0 : index
    %c0_8 = arith.constant 0 : index
    %c0_9 = arith.constant 0 : index
    %9 = vector.load %arg6[%c0_7, %c0_8, %c0_9] : memref<1x17x32xf32, #tpu.memory_space<vmem>>, vector<1x1x32xf32>
    tpu.vector_store %arg6[%c0_7, %c0_8, %c0_9], %8 {strides = array<i32>} : memref<1x17x32xf32, #tpu.memory_space<vmem>>, vector<1x1x32xf32>,
    %c0_10 = arith.constant 0 : index
    %c1 = arith.constant 1 : index
    %c0_11 = arith.constant 0 : index
    %10 = vector.load %arg6[%c0_10, %c1, %c0_11] : memref<1x17x32xf32, #tpu.memory_space<vmem>>, vector<1x16x32xf32>
    tpu.vector_store %arg6[%c0_10, %c1, %c0_11], %6 {strides = array<i32>} : memref<1x17x32xf32, #tpu.memory_space<vmem>>, vector<1x16x32xf32>,
    return
  }
  func.func @transform_0(%arg0: i32, %arg1: i32) -> (i32, i32) {
    %c0_i32 = arith.constant 0 : i32
    %c0_i32_0 = arith.constant 0 : i32
    return %arg0, %c0_i32 : i32, i32
  }
  func.func @transform_1(%arg0: i32, %arg1: i32) -> (i32, i32) {
    %c0_i32 = arith.constant 0 : i32
    %c0_i32_0 = arith.constant 0 : i32
    return %c0_i32, %arg1 : i32, i32
  }
  func.func @transform_2(%arg0: i32, %arg1: i32) -> (i32, i32) {
    %c0_i32 = arith.constant 0 : i32
    %c0_i32_0 = arith.constant 0 : i32
    return %c0_i32, %arg1 : i32, i32
  }
  func.func @transform_3(%arg0: i32, %arg1: i32) -> (i32, i32) {
    %c0_i32 = arith.constant 0 : i32
    %c0_i32_0 = arith.constant 0 : i32
    return %c0_i32, %arg1 : i32, i32
  }
  func.func @transform_4(%arg0: i32, %arg1: i32) -> (i32, i32, i32) {
    %c0_i32 = arith.constant 0 : i32
    %c0_i32_0 = arith.constant 0 : i32
    return %arg0, %c0_i32, %arg1 : i32, i32, i32
  }
}

</mosaic_0001>

<llo_original>
// kernel: tpu_custom_call.1
$region0: #{tpu_custom_call.1}
  #allocation0 [shape = 'u32[]', space=smem, size = 0x4, offset = 0x4, fixed_abs, tag = 'smem constant byte address 0x4 - core index']
  #allocation1 [shape = 'u32[144,128]{1,0:T(1,128)}', space=vmem, size = 0x12000, scoped, tag = 'internal scratch']
  %s0 = inlined_call_operand.vmem [shape: f32[32,64], index: 0, kind: input, shape index: {}]
  %s1 = inlined_call_operand.vmem [shape: f32[64,32], index: 1, kind: input, shape index: {}]
  %s2 = inlined_call_operand.vmem [shape: f32[16,32], index: 2, kind: input, shape index: {}]
  %s3 = inlined_call_operand.vmem [shape: f32[1,32], index: 3, kind: input, shape index: {}]
  %s4 = inlined_call_operand.vmem [shape: f32[2,17,32], index: 4, kind: output, shape index: {}]
  %s5 = sld [smem:[#allocation0]]
  $region49: #{tpu_custom_call.1} parent=0
    _
  %s7 = ssub.s32 1, %s5
  %s8 = scalar_select 0, %s7, %s5
  loop: start=0, step=1, limit=4
  $region2: #{tpu_custom_call.1} parent=0 // loop_pre_header
    _
  $region3: #{tpu_custom_call.1} parent=0 // loop_header
    %s10 = sphi 0, %s14
    %p11 = scmp.ge.s32.totalorder %s10, 4
    %s17 = sphi 0, %s29
    %s18 = sphi 0, %s25
    %s19 = sphi 0, %s17
    %s20 = sphi 0, %s18
    %s21 = sphi 0, %s19
    %s22 = sphi 0, %s20
    %s32 = sphi 0, %s34
    %s35 = sphi 0, %s32
    %s36 = sphi 0, %s35
    %s52 = sphi 0, %s36
    %s58 = sphi 0, %s60
    %s61 = sphi 0, %s58
    %s62 = sphi 0, %s61
    %s78 = sphi 0, %s62
    %s84 = sphi 0, %s86
    %s87 = sphi 0, %s84
    %s88 = sphi 0, %s87
    %s104 = sphi 0, %s88
    %s110 = sphi 0, %s112
    %s113 = sphi 0, %s110
    %s114 = sphi 0, %s113
    %s130 = sphi 0, %s114
    %s138 = sphi 0, %s140
    %s141 = sphi 0, %s138
    %s142 = sphi 0, %s141
    %s158 = sphi 0, %s142
  $region4: #{tpu_custom_call.1} parent=0 // loop_header_branch
    %13 = sbr.rel (%p11) target = $region8
  $region5: #{tpu_custom_call.1} parent=0 // loop_body
    %s15 = ssub.s32 %s10, 1
    %s16 = ssub.s32 %s10, 2
    %s23 = sadd.s32 1, %s18
    %p24 = scmp.ge.s32.totalorder %s23, 1
    %s25 = scalar_select %p24, 0, %s23
    %s26 = sadd.s32 1, %s17
    %s27 = scalar_select %p24, %s26, %s17
    %p28 = scmp.ge.s32.totalorder %s27, 2
    %s29 = scalar_select %p28, 0, %s27
    %s30 = ssub.s32 %s17, %s29
    %p31 = scmp.eq.s32.totalorder %s30, 0
    %s33 = sadd.s32 %s32, 1
    %s34 = scalar_select %p31, %s32, %s33
    %p37 = pneg %p31
    %p38 = scmp.eq.s32.totalorder %s10, 1
    %p39 = por %p37, %p38
    %p40 = scmp.ne.s32.totalorder %s32, %s35
    %p41 = scmp.eq.s32.totalorder %s10, 0
    %p42 = por %p40, %p41
    %p43 = scmp.ne.s32.totalorder %s32, %s35
    %p44 = scmp.eq.s32.totalorder %s15, 1
    %p45 = por %p43, %p44
    %p46 = scmp.ne.s32.totalorder %s35, %s36
    %p47 = scmp.eq.s32.totalorder %s15, 0
    %p48 = por %p46, %p47
    %p49 = scmp.ne.s32.totalorder %s35, %s36
    %p50 = scmp.eq.s32.totalorder %s16, 1
    %p51 = por %p49, %p50
    %p53 = scmp.ne.s32.totalorder %s36, %s52
    %p54 = scmp.eq.s32.totalorder %s16, 0
    %p55 = por %p53, %p54
    %s56 = ssub.s32 %s18, %s25
    %p57 = scmp.eq.s32.totalorder %s56, 0
    %s59 = sadd.s32 %s58, 1
    %s60 = scalar_select %p57, %s58, %s59
    %p63 = pneg %p57
    %p64 = scmp.eq.s32.totalorder %s10, 1
    %p65 = por %p63, %p64
    %p66 = scmp.ne.s32.totalorder %s58, %s61
    %p67 = scmp.eq.s32.totalorder %s10, 0
    %p68 = por %p66, %p67
    %p69 = scmp.ne.s32.totalorder %s58, %s61
    %p70 = scmp.eq.s32.totalorder %s15, 1
    %p71 = por %p69, %p70
    %p72 = scmp.ne.s32.totalorder %s61, %s62
    %p73 = scmp.eq.s32.totalorder %s15, 0
    %p74 = por %p72, %p73
    %p75 = scmp.ne.s32.totalorder %s61, %s62
    %p76 = scmp.eq.s32.totalorder %s16, 1
    %p77 = por %p75, %p76
    %p79 = scmp.ne.s32.totalorder %s62, %s78
    %p80 = scmp.eq.s32.totalorder %s16, 0
    %p81 = por %p79, %p80
    %s82 = ssub.s32 %s18, %s25
    %p83 = scmp.eq.s32.totalorder %s82, 0
    %s85 = sadd.s32 %s84, 1
    %s86 = scalar_select %p83, %s84, %s85
    %p89 = pneg %p83
    %p90 = scmp.eq.s32.totalorder %s10, 1
    %p91 = por %p89, %p90
    %p92 = scmp.ne.s32.totalorder %s84, %s87
    %p93 = scmp.eq.s32.totalorder %s10, 0
    %p94 = por %p92, %p93
    %p95 = scmp.ne.s32.totalorder %s84, %s87
    %p96 = scmp.eq.s32.totalorder %s15, 1
    %p97 = por %p95, %p96
    %p98 = scmp.ne.s32.totalorder %s87, %s88
    %p99 = scmp.eq.s32.totalorder %s15, 0
    %p100 = por %p98, %p99
    %p101 = scmp.ne.s32.totalorder %s87, %s88
    %p102 = scmp.eq.s32.totalorder %s16, 1
    %p103 = por %p101, %p102
    %p105 = scmp.ne.s32.totalorder %s88, %s104
    %p106 = scmp.eq.s32.totalorder %s16, 0
    %p107 = por %p105, %p106
    %s108 = ssub.s32 %s18, %s25
    %p109 = scmp.eq.s32.totalorder %s108, 0
    %s111 = sadd.s32 %s110, 1
    %s112 = scalar_select %p109, %s110, %s111
    %p115 = pneg %p109
    %p116 = scmp.eq.s32.totalorder %s10, 1
    %p117 = por %p115, %p116
    %p118 = scmp.ne.s32.totalorder %s110, %s113
    %p119 = scmp.eq.s32.totalorder %s10, 0
    %p120 = por %p118, %p119
    %p121 = scmp.ne.s32.totalorder %s110, %s113
    %p122 = scmp.eq.s32.totalorder %s15, 1
    %p123 = por %p121, %p122
    %p124 = scmp.ne.s32.totalorder %s113, %s114
    %p125 = scmp.eq.s32.totalorder %s15, 0
    %p126 = por %p124, %p125
    %p127 = scmp.ne.s32.totalorder %s113, %s114
    %p128 = scmp.eq.s32.totalorder %s16, 1
    %p129 = por %p127, %p128
    %p131 = scmp.ne.s32.totalorder %s114, %s130
    %p132 = scmp.eq.s32.totalorder %s16, 0
    %p133 = por %p131, %p132
    %s134 = ssub.s32 %s17, %s29
    %s135 = ssub.s32 %s18, %s25
    %s136 = sor.u32 %s134, %s135
    %p137 = scmp.eq.s32.totalorder %s136, 0
    %s139 = sadd.s32 %s138, 1
    %s140 = scalar_select %p137, %s138, %s139
    %p143 = pneg %p137
    %p144 = scmp.eq.s32.totalorder %s10, 1
    %p145 = por %p143, %p144
    %p146 = scmp.ne.s32.totalorder %s138, %s141
    %p147 = scmp.eq.s32.totalorder %s10, 0
    %p148 = por %p146, %p147
    %p149 = scmp.ne.s32.totalorder %s138, %s141
    %p150 = scmp.eq.s32.totalorder %s15, 1
    %p151 = por %p149, %p150
    %p152 = scmp.ne.s32.totalorder %s141, %s142
    %p153 = scmp.eq.s32.totalorder %s15, 0
    %p154 = por %p152, %p153
    %p155 = scmp.ne.s32.totalorder %s141, %s142
    %p156 = scmp.eq.s32.totalorder %s16, 1
    %p157 = por %p155, %p156
    %p159 = scmp.ne.s32.totalorder %s142, %s158
    %p160 = scmp.eq.s32.totalorder %s16, 0
    %p161 = por %p159, %p160
    %p162 = scmp.le.s32.totalorder 1, %s10
    %p163 = scmp.lt.s32.totalorder %s10, 3
    %p164 = pnand %p162, %p163
    %p165 = pneg %p164
    // Predicated region
    $region9: #{tpu_custom_call.1} parent=5 // pred_check
      _
    $region10: #{tpu_custom_call.1} parent=5 // pred_check_branch
      %167 = sbr.rel (%p164) target = $region12
    $region11: #{tpu_custom_call.1} parent=5 // pred_region
      %s168 = ssub.s32 %s10, 1
      // Predicated region
      $region13: #{tpu_custom_call.1} parent=11 // pred_check
        %p169 = pneg %p74
      $region14: #{tpu_custom_call.1} parent=11 // pred_check_branch
        %171 = sbr.rel (%p169) target = $region16
      $region15: #{tpu_custom_call.1} parent=11 // pred_region
        %p172 = scmp.lt.s32.totalorder %s20, 0
        %s173 = scalar_select %p172, %s20, 0
        %s174 = smul.addr %s173, 8
        %s175 = scalar_lea.vmem %s1, %s174
      $region16: #{tpu_custom_call.1} parent=11 // pred_fallthru
        _
      // Predicated region
      $region17: #{tpu_custom_call.1} parent=11 // pred_check
        %p176 = pneg %p100
      $region18: #{tpu_custom_call.1} parent=11 // pred_check_branch
        %178 = sbr.rel (%p176) target = $region20
      $region19: #{tpu_custom_call.1} parent=11 // pred_region
        %p179 = scmp.lt.s32.totalorder %s20, 0
        %s180 = scalar_select %p179, %s20, 0
        %s181 = smul.addr %s180, 8
        %s182 = scalar_lea.vmem %s2, %s181
      $region20: #{tpu_custom_call.1} parent=11 // pred_fallthru
        _
      // Predicated region
      $region21: #{tpu_custom_call.1} parent=11 // pred_check
        %p183 = pneg %p126
      $region22: #{tpu_custom_call.1} parent=11 // pred_check_branch
        %185 = sbr.rel (%p183) target = $region24
      $region23: #{tpu_custom_call.1} parent=11 // pred_region
        %p186 = scmp.lt.s32.totalorder %s20, 0
        %s187 = scalar_select %p186, %s20, 0
        %s188 = scalar_lea.vmem %s3, %s187
      $region24: #{tpu_custom_call.1} parent=11 // pred_fallthru
        _
    $region12: #{tpu_custom_call.1} parent=5 // pred_fallthru
      _
    %p189 = scmp.lt.s32.totalorder %s10, 2
    // Predicated region
    $region25: #{tpu_custom_call.1} parent=5 // pred_check
      %p190 = pneg %p189
    $region26: #{tpu_custom_call.1} parent=5 // pred_check_branch
      %192 = sbr.rel (%p190) target = $region28
    $region27: #{tpu_custom_call.1} parent=5 // pred_region
      // Predicated region
      $region29: #{tpu_custom_call.1} parent=27 // pred_check
        %p193 = pneg %p42
      $region30: #{tpu_custom_call.1} parent=27 // pred_check_branch
        %195 = sbr.rel (%p193) target = $region32
      $region31: #{tpu_custom_call.1} parent=27 // pred_region
        %s196 = smul.u32 2, %s17
        %p197 = scmp.lt.s32.totalorder %s196, 3
        %s198 = scalar_select %p197, %s196, 3
        %s199 = smul.addr %s198, 8
        %s200 = scalar_lea.vmem %s0, %s199
        %s201 = smul.u32 2, %s17
      $region32: #{tpu_custom_call.1} parent=27 // pred_fallthru
        _
    $region28: #{tpu_custom_call.1} parent=5 // pred_fallthru
      _
    %p202 = scmp.le.s32.totalorder 1, %s10
    %p203 = scmp.lt.s32.totalorder %s10, 3
    %p204 = pnand %p202, %p203
    %p205 = pneg %p204
    // Predicated region
    $region33: #{tpu_custom_call.1} parent=5 // pred_check
      _
    $region34: #{tpu_custom_call.1} parent=5 // pred_check_branch
      %207 = sbr.rel (%p204) target = $region36
    $region35: #{tpu_custom_call.1} parent=5 // pred_region
      %s208 = ssub.s32 %s10, 1
      %s209 = smul.u32 2, %s19
      %p210 = scmp.lt.s32.totalorder %s209, 3
      %s211 = scalar_select %p210, %s209, 3
      %s212 = smul.addr %s211, 8
      %s213 = scalar_lea.vmem %s0, %s212
      %p214 = pneg %p48
      %p215 = pneg %p45
      %p216 = scmp.lt.s32.totalorder %s20, 0
      %s217 = scalar_select %p216, %s20, 0
      %s218 = smul.addr %s217, 8
      %s219 = scalar_lea.vmem %s1, %s218
      %p220 = pneg %p74
      %p221 = pneg %p71
      %p222 = scmp.lt.s32.totalorder %s20, 0
      %s223 = scalar_select %p222, %s20, 0
      %s224 = smul.addr %s223, 8
      %s225 = scalar_lea.vmem %s2, %s224
      %p226 = pneg %p100
      %p227 = pneg %p97
      %p228 = scmp.lt.s32.totalorder %s20, 0
      %s229 = scalar_select %p228, %s20, 0
      %s230 = scalar_lea.vmem %s3, %s229
      %p231 = pneg %p126
      %p232 = pneg %p123
      %p233 = pneg %p154
      %p234 = pneg %p151
      %p235 = scmp.lt.s32.totalorder %s19, 1
      %s236 = scalar_select %p235, %s19, 1
      %p237 = scmp.lt.s32.totalorder %s20, 0
      %s238 = scalar_select %p237, %s20, 0
      %s239 = smul.addr %s236, 3
      %s240 = sadd.s32 %s238, %s239
      %s241 = smul.addr %s240, 8
      %s242 = scalar_lea.vmem %s4, %s241
      %s243 = smul.u32 2, %s19
      %p244 = scmp.lt.s32.totalorder %s243, 3
      %s245 = scalar_select %p244, %s243, 3
      %s246 = smul.addr %s245, 8
      %s247 = scalar_lea.vmem %s0, %s246
      %s248 = smul.u32 2, %s19
      %p249 = scmp.lt.s32.totalorder %s20, 0
      %s250 = scalar_select %p249, %s20, 0
      %s251 = smul.addr %s250, 8
      %s252 = scalar_lea.vmem %s1, %s251
      %p253 = scmp.lt.s32.totalorder %s20, 0
      %s254 = scalar_select %p253, %s20, 0
      %s255 = smul.addr %s254, 8
      %s256 = scalar_lea.vmem %s2, %s255
      %p257 = scmp.lt.s32.totalorder %s20, 0
      %s258 = scalar_select %p257, %s20, 0
      %s259 = scalar_lea.vmem %s3, %s258
      %p260 = scmp.lt.s32.totalorder %s19, 1
      %s261 = scalar_select %p260, %s19, 1
      %p262 = scmp.lt.s32.totalorder %s20, 0
      %s263 = scalar_select %p262, %s20, 0
      %s264 = smul.addr %s261, 3
      %s265 = sadd.s32 %s263, %s264
      %s266 = smul.addr %s265, 8
      %s267 = scalar_lea.vmem %s4, %s266
      %v268 = vld [vmem:[%s247] sm:$0xff]
      %v269 = vld [vmem:[%s247 + $0x8] sm:$0xff]
      %v270 = vld [vmem:[%s252] sm:$0xff]
      %v271 = vld [vmem:[%s252 + $0x8] sm:$0xff]
      %v272 = vld [vmem:[%s252 + $0x10] sm:$0xff]
      %v273 = vld [vmem:[%s252 + $0x18] sm:$0xff]
      %v274 = vld [vmem:[%s252 + $0x20] sm:$0xff]
      %v275 = vld [vmem:[%s252 + $0x28] sm:$0xff]
      %v276 = vld [vmem:[%s252 + $0x30] sm:$0xff]
      %v277 = vld [vmem:[%s252 + $0x38] sm:$0xff]
      %vm278 = vcmask 523264
      %v280 = vsel %vm278, %v268, 0
      %v283 = vsel %vm278, %v269, 0
      %285 = vmatprep.subr.mxu0 0.0
      %286 = vmatpush1.msra.mxu0 0.0
      %287 = vmatprep.subr.mxu0 0.0
      %288 = vmatpush1.msra.mxu0 0.0
      %289 = vmatprep.subr.mxu0 0.0
      %290 = vmatpush1.msra.mxu0 0.0
      %291 = vmatprep.subr.mxu0 0.0
      %292 = vmatpush1.msra.mxu0 0.0
      %293 = vmatprep.subr.mxu0 0.0
      %294 = vmatpush1.msra.mxu0 0.0
      %295 = vmatprep.subr.mxu0 0.0
      %296 = vmatpush1.msra.mxu0 0.0
      %297 = vmatprep.subr.mxu0 0.0
      %298 = vmatpush1.msra.mxu0 0.0
      %299 = vmatprep.subr.mxu0 0.0
      %300 = vmatpush1.msra.mxu0 0.0
      %301 = vmatprep.subr.mxu0 0.0
      %302 = vmatpush1.msra.mxu0 %v277
      %303 = vmatprep.subr.mxu0 0.0
      %304 = vmatpush1.msra.mxu0 %v276
      %305 = vmatprep.subr.mxu0 0.0
      %306 = vmatpush1.msra.mxu0 %v275
      %307 = vmatprep.subr.mxu0 0.0
      %308 = vmatpush1.msra.mxu0 %v274
      %309 = vmatprep.subr.mxu0 0.0
      %310 = vmatpush1.msra.mxu0 %v273
      %311 = vmatprep.subr.mxu0 0.0
      %312 = vmatpush1.msra.mxu0 %v272
      %313 = vmatprep.subr.mxu0 0.0
      %314 = vmatpush1.msra.mxu0 %v271
      %315 = vmatprep.subr.mxu0 0.0
      %316 = vmatpush1.msra.mxu0 %v270
      %317 = vmatprep.subr.mxu0 0.0
      %318 = vmatpush2.msra.mxu0 0.0
      %319 = vmatprep.subr.mxu0 0.0
      %320 = vmatpush2.msra.mxu0 0.0
      %321 = vmatprep.subr.mxu0 0.0
      %322 = vmatpush2.msra.mxu0 0.0
      %323 = vmatprep.subr.mxu0 0.0
      %324 = vmatpush2.msra.mxu0 0.0
      %325 = vmatprep.subr.mxu0 0.0
      %326 = vmatpush2.msra.mxu0 0.0
      %327 = vmatprep.subr.mxu0 0.0
      %328 = vmatpush2.msra.mxu0 0.0
      %329 = vmatprep.subr.mxu0 0.0
      %330 = vmatpush2.msra.mxu0 0.0
      %331 = vmatprep.subr.mxu0 0.0
      %332 = vmatpush2.msra.mxu0 0.0
      %333 = vmatprep.subr.mxu0 0.0
      %334 = vmatpush2.msra.mxu0 0.0
      %335 = vmatprep.subr.mxu0 0.0
      %336 = vmatpush2.msra.mxu0 0.0
      %337 = vmatprep.subr.mxu0 0.0
      %338 = vmatpush2.msra.mxu0 0.0
      %339 = vmatprep.subr.mxu0 0.0
      %340 = vmatpush2.msra.mxu0 0.0
      %341 = vmatprep.subr.mxu0 0.0
      %342 = vmatpush2.msra.mxu0 0.0
      %343 = vmatprep.subr.mxu0 0.0
      %344 = vmatpush2.msra.mxu0 0.0
      %345 = vmatprep.subr.mxu0 0.0
      %346 = vmatpush2.msra.mxu0 0.0
      %347 = vmatprep.subr.mxu0 0.0
      %348 = vmatpush2.msra.mxu0 0.0
      %349 = vmatprep.mubr.f32.mxu0 0.0
      %350 = vmatmul.mubr.f32.gmra.mxu0 %v280
      %v351 = vpop.f32.mrf.mxu0
      %v352 = vadd.f32 0.0, %v351
      %v353 = vpop.f32.mrf.mxu0
      %354 = vmatprep.mubr.f32.mxu0 0.0
      %355 = vmatmul.mubr.f32.gmra.mxu0 %v283
      %v356 = vpop.f32.mrf.mxu0
      %v357 = vadd.f32 0.0, %v356
      %v358 = vpop.f32.mrf.mxu0
      %359 = vdwg.mxu0
      %v360 = vld [vmem:[%s256] sm:$0xff]
      %v361 = vld [vmem:[%s256 + $0x8] sm:$0xff]
      %v362 = vadd.f32 %v352, %v360
      %v363 = vadd.f32 %v357, %v361
      %v364 = vld [vmem:[%s259] sm:$0x1]
      %vm365 = vcmask 253952
      %366 = vst.msk [vmem:[%s267] sm:$0x1] %vm365, %v364
      %vm367 = vcmask 261120
      %368 = vst.msk [vmem:[%s267 + $0x1] sm:$0xff] %vm367, %v362
      %369 = vst.msk [vmem:[%s267 + $0x9] sm:$0xff] %vm367, %v363
      %p370 = scmp.lt.s32.totalorder %s19, 1
      %s371 = scalar_select %p370, %s19, 1
      %p372 = scmp.lt.s32.totalorder %s20, 0
      %s373 = scalar_select %p372, %s20, 0
      %s374 = smul.addr %s371, 3
      %s375 = sadd.s32 %s373, %s374
      %s376 = smul.addr %s375, 8
      %s377 = scalar_lea.vmem %s4, %s376
      // Predicated region
      $region37: #{tpu_custom_call.1} parent=35 // pred_check
        %p378 = pneg %p151
      $region38: #{tpu_custom_call.1} parent=35 // pred_check_branch
        %380 = sbr.rel (%p378) target = $region40
      $region39: #{tpu_custom_call.1} parent=35 // pred_region
        _
      $region40: #{tpu_custom_call.1} parent=35 // pred_fallthru
        _
    $region36: #{tpu_custom_call.1} parent=5 // pred_fallthru
      _
    %p381 = scmp.le.s32.totalorder 2, %s10
    // Predicated region
    $region41: #{tpu_custom_call.1} parent=5 // pred_check
      %p382 = pneg %p381
    $region42: #{tpu_custom_call.1} parent=5 // pred_check_branch
      %384 = sbr.rel (%p382) target = $region44
    $region43: #{tpu_custom_call.1} parent=5 // pred_region
      %s385 = ssub.s32 %s10, 2
      // Predicated region
      $region45: #{tpu_custom_call.1} parent=43 // pred_check
        %p386 = pneg %p157
      $region46: #{tpu_custom_call.1} parent=43 // pred_check_branch
        %388 = sbr.rel (%p386) target = $region48
      $region47: #{tpu_custom_call.1} parent=43 // pred_region
        %p389 = scmp.lt.s32.totalorder %s21, 1
        %s390 = scalar_select %p389, %s21, 1
        %p391 = scmp.lt.s32.totalorder %s22, 0
        %s392 = scalar_select %p391, %s22, 0
        %s393 = smul.addr %s390, 3
        %s394 = sadd.s32 %s392, %s393
        %s395 = smul.addr %s394, 8
        %s396 = scalar_lea.vmem %s4, %s395
      $region48: #{tpu_custom_call.1} parent=43 // pred_fallthru
        _
    $region44: #{tpu_custom_call.1} parent=5 // pred_fallthru
      _
  $region6: #{tpu_custom_call.1} parent=0 // loop_footer
    %s14 = sadd.s32 1, %s10
  $region7: #{tpu_custom_call.1} parent=0 // loop_footer_branch
    %9 = sbr.rel target = $region3
  $region8: #{tpu_custom_call.1} parent=0 // loop_exit
    _

</llo_original>
